<compile_context>
chip_gen: v7x
topology: tpu7x:2x2x1
jax: 0.10.0
libtpu: 0.0.40
codegen_flags: <defaults>
</compile_context>

<pallas_src>
import functools

import jax
import jax.numpy as jnp
from jax.experimental import pallas as pl
from jax.experimental.pallas import tpu as pltpu

_LANES = 128


def _rmse_partial_kernel(yhat_ref, y_ref, out_ref, *, tile_rows, rows_valid,
                         steps_per_core, needs_mask):
    """Accumulate sum((yhat - y)^2) of one (tile_rows, 128) block into an
    (8, 128) per-core accumulator resident across the inner grid axis."""
    c = pl.program_id(0)
    i = pl.program_id(1)

    @pl.when(i == 0)
    def _():
        out_ref[...] = jnp.zeros_like(out_ref)

    d = yhat_ref[...].astype(jnp.float32) - y_ref[...].astype(jnp.float32)
    sq = d * d

    if needs_mask:
        # Partial last block / overflow steps: zero rows past the slab end.
        # Undefined padding (possibly inf/nan) is squashed by the select.
        start_row = (c * steps_per_core + i) * tile_rows
        row_ids = jax.lax.broadcasted_iota(jnp.int32, (tile_rows, 1), 0)
        sq = jnp.where(start_row + row_ids < rows_valid, sq, 0.0)

    # (tile_rows, 128) -> (tile_rows//8, 8, 128) does not cross (8, 128) tile
    # boundaries; sum(axis=0) is a chain of vreg-wise VPU adds (no XLU).
    out_ref[...] += sq.reshape(tile_rows // 8, 8, _LANES).sum(axis=0)


def _detect_num_tensorcores():
    """Best-effort TensorCore count (2 on v7x, 1 on v5e/v6e); 0 if unknown."""
    try:
        info = pltpu.get_tpu_info()
    except Exception:
        return 0
    for name in ("num_cores", "num_tensorcores", "tensorcores_per_chip",
                 "cores_per_chip", "core_count"):
        v = getattr(info, name, None)
        if v is None:
            continue
        try:
            v = int(v)
        except (TypeError, ValueError):
            continue
        if v >= 1:
            return v
    return 0


def _pick_tile_rows(rows, dtype, tile_rows):
    """Largest legal block height: a multiple of the dtype's sublane packing
    (8 f32, 16 bf16, 32 int8/fp8) or exactly the full dimension, and always a
    multiple of 8 so the in-kernel (.., 8, 128) fold is valid."""
    tile_rows = max(32, (tile_rows // 32) * 32)   # multiple of 32: all dtypes
    if rows >= tile_rows:
        return tile_rows
    if rows % 8 == 0:
        return rows                               # full-dim block: always legal
    sub = max(8, 32 // jnp.dtype(dtype).itemsize)
    return (rows // sub) * sub                    # may be 0 -> caller falls back


def rmse_loss(yhat, y, *, tile_rows=4096):
    assert yhat.shape == y.shape, "yhat and y must have identical shapes"
    n = yhat.size

    yhat_f = yhat.reshape(-1)
    y_f = y.reshape(-1)

    rows = n // _LANES
    tile_rows_eff = _pick_tile_rows(rows, yhat.dtype, tile_rows) if rows >= 8 else 0

    # TODO(synk): ragged element counts (n % 128 != 0) and tiny inputs take a
    # single-pass jnp reduction (reads each input exactly once, avoids the
    # aligned-prefix slice copy flagged in review); an in-kernel masked
    # handling of the sub-128 tail would keep everything in one pallas_call.
    if n % _LANES != 0 or tile_rows_eff < 8:
        d = yhat_f.astype(jnp.float32) - y_f.astype(jnp.float32)
        return jnp.sqrt(jnp.sum(d * d) / n)   # n == 0 -> nan, matches torch

    # Free reshape (n is a multiple of 128): no HBM copy before the kernel.
    yhat_slab = yhat_f.reshape(rows, _LANES)
    y_slab = y_f.reshape(rows, _LANES)

    blocks_total = pl.cdiv(rows, tile_rows_eff)
    detected = _detect_num_tensorcores()
    if detected >= 1:
        n_cores = min(detected, blocks_total)
    else:
        n_cores = 2 if blocks_total >= 2 else 1
    steps_per_core = pl.cdiv(blocks_total, n_cores)

    # Mask only when some block is partial or some step overflows past the
    # last block (trace-time decision: zero cost on aligned shapes).
    needs_mask = (n_cores * steps_per_core != blocks_total
                  or blocks_total * tile_rows_eff != rows)

    if n_cores * steps_per_core == blocks_total:
        def in_map(c, i):
            return (c * steps_per_core + i, 0)
    else:
        last_block = blocks_total - 1

        def in_map(c, i):
            # Overflow steps re-read the last real block; their contribution
            # is fully masked to zero inside the kernel.
            return (jnp.minimum(c * steps_per_core + i, last_block), 0)

    kernel = functools.partial(
        _rmse_partial_kernel,
        tile_rows=tile_rows_eff,
        rows_valid=rows,
        steps_per_core=steps_per_core,
        needs_mask=needs_mask,
    )

    in_bytes = rows * _LANES * (jnp.dtype(yhat.dtype).itemsize
                                + jnp.dtype(y.dtype).itemsize)
    cost = pl.CostEstimate(
        flops=3 * rows * _LANES,               # sub, mul, add per element
        transcendentals=0,
        bytes_accessed=in_bytes + n_cores * 8 * _LANES * 4,
    )

    # TODO(synk): on v7x consider dimension_semantics=(pltpu.CORE_PARALLEL,
    # "arbitrary") and pipeline_mode=pl.Buffered(3) on the input BlockSpecs
    # once verified on hardware; plain "parallel" is kept here for safety.
    partials = pl.pallas_call(
        kernel,
        out_shape=jax.ShapeDtypeStruct((n_cores, 8, _LANES), jnp.float32),
        grid_spec=pltpu.PrefetchScalarGridSpec(
            num_scalar_prefetch=0,
            grid=(n_cores, steps_per_core),
            in_specs=[
                pl.BlockSpec((tile_rows_eff, _LANES), in_map),
                pl.BlockSpec((tile_rows_eff, _LANES), in_map),
            ],
            out_specs=pl.BlockSpec((None, 8, _LANES), lambda c, i: (c, 0, 0)),
        ),
        compiler_params=pltpu.CompilerParams(
            dimension_semantics=("parallel", "arbitrary")),
        cost_estimate=cost,
    )(yhat_slab, y_slab)

    # Tiny (n_cores, 8, 128) cross-lane reduce + sqrt stay in the wrapper.
    return jnp.sqrt(jnp.sum(partials) / n)


if __name__ == "__main__":
    key = jax.random.PRNGKey(0)
    k1, k2 = jax.random.split(key)

    # small NCHW-like tensors, matching the PyTorch module's usage
    yhat = jax.random.normal(k1, (2, 4, 16, 16), dtype=jnp.float32)
    y = jax.random.normal(k2, (2, 4, 16, 16), dtype=jnp.float32)

    loss = jax.block_until_ready(rmse_loss(yhat, y))

    # reference: sqrt(mean((yhat - y)^2))
    ref = jnp.sqrt(jnp.mean((yhat - y) ** 2))
    assert jnp.allclose(loss, ref, rtol=1e-5, atol=1e-6), (loss, ref)

    print("KERNEL_OK")
</pallas_src>

<mosaic_0001>
module attributes {stable_mosaic.version = 11 : i64} {
  func.func @_rmse_partial_kernel(%arg0: i32, %arg1: i32, %arg2: memref<16x128xf32, #tpu.memory_space<vmem>>, %arg3: memref<16x128xf32, #tpu.memory_space<vmem>>, %arg4: memref<1x8x128xf32, #tpu.memory_space<vmem>>) attributes {dimension_semantics = [#tpu.dimension_semantics<parallel>, #tpu.dimension_semantics<arbitrary>], iteration_bounds = array<i64: 1, 1>, scalar_prefetch = 0 : i64, scratch_operands = 0 : i64, tpu.core_type = #tpu.core_type<tc>, window_params = [{transform_indices = @transform_0, window_bounds = array<i64: 16, 128>}, {transform_indices = @transform_1, window_bounds = array<i64: 16, 128>}, {transform_indices = @transform_2, window_bounds = array<i64: 1, 8, 128>}]} {
    %c0_i32 = arith.constant 0 : i32
    %0 = arith.cmpi eq, %arg1, %c0_i32 : i32
    %1 = arith.extui %0 : i1 to i32
    %c0_i32_0 = arith.constant 0 : i32
    %2 = arith.cmpi ne, %1, %c0_i32_0 : i32
    scf.if %2 {
      %cst_10 = arith.constant 0.000000e+00 : f32
      %15 = vector.broadcast %cst_10 : f32 to vector<8x128xf32>
      %c0_11 = arith.constant 0 : index
      %c0_12 = arith.constant 0 : index
      %c0_13 = arith.constant 0 : index
      %16 = vector.load %arg4[%c0_11, %c0_12, %c0_13] : memref<1x8x128xf32, #tpu.memory_space<vmem>>, vector<1x8x128xf32>
      %17 = vector.shape_cast %16 : vector<1x8x128xf32> to vector<8x128xf32>
      %18 = vector.shape_cast %15 : vector<8x128xf32> to vector<1x8x128xf32>
      tpu.vector_store %arg4[%c0_11, %c0_12, %c0_13], %18 {strides = array<i32>} : memref<1x8x128xf32, #tpu.memory_space<vmem>>, vector<1x8x128xf32>,
    } else {
    }
    %c0 = arith.constant 0 : index
    %c0_1 = arith.constant 0 : index
    %3 = vector.load %arg2[%c0, %c0_1] : memref<16x128xf32, #tpu.memory_space<vmem>>, vector<16x128xf32>
    %c0_2 = arith.constant 0 : index
    %c0_3 = arith.constant 0 : index
    %4 = vector.load %arg3[%c0_2, %c0_3] : memref<16x128xf32, #tpu.memory_space<vmem>>, vector<16x128xf32>
    %5 = arith.subf %3, %4 : vector<16x128xf32>
    %6 = arith.mulf %5, %5 : vector<16x128xf32>
    %c0_4 = arith.constant 0 : index
    %c0_5 = arith.constant 0 : index
    %c0_6 = arith.constant 0 : index
    %7 = vector.load %arg4[%c0_4, %c0_5, %c0_6] : memref<1x8x128xf32, #tpu.memory_space<vmem>>, vector<1x8x128xf32>
    %8 = vector.shape_cast %7 : vector<1x8x128xf32> to vector<8x128xf32>
    %9 = vector.shape_cast %6 : vector<16x128xf32> to vector<2x8x128xf32>
    %cst = arith.constant dense<0.000000e+00> : vector<8x128xf32>
    %10 = vector.multi_reduction <add>, %9, %cst [0] : vector<2x8x128xf32> to vector<8x128xf32>
    %11 = arith.addf %8, %10 : vector<8x128xf32>
    %c0_7 = arith.constant 0 : index
    %c0_8 = arith.constant 0 : index
    %c0_9 = arith.constant 0 : index
    %12 = vector.load %arg4[%c0_7, %c0_8, %c0_9] : memref<1x8x128xf32, #tpu.memory_space<vmem>>, vector<1x8x128xf32>
    %13 = vector.shape_cast %12 : vector<1x8x128xf32> to vector<8x128xf32>
    %14 = vector.shape_cast %11 : vector<8x128xf32> to vector<1x8x128xf32>
    tpu.vector_store %arg4[%c0_7, %c0_8, %c0_9], %14 {strides = array<i32>} : memref<1x8x128xf32, #tpu.memory_space<vmem>>, vector<1x8x128xf32>,
    return
  }
  func.func @transform_0(%arg0: i32, %arg1: i32) -> (i32, i32) {
    %c1_i32 = arith.constant 1 : i32
    %0 = arith.muli %arg0, %c1_i32 : i32
    %1 = arith.addi %0, %arg1 : i32
    %c0_i32 = arith.constant 0 : i32
    %c0_i32_0 = arith.constant 0 : i32
    return %1, %c0_i32 : i32, i32
  }
  func.func @transform_1(%arg0: i32, %arg1: i32) -> (i32, i32) {
    %c1_i32 = arith.constant 1 : i32
    %0 = arith.muli %arg0, %c1_i32 : i32
    %1 = arith.addi %0, %arg1 : i32
    %c0_i32 = arith.constant 0 : i32
    %c0_i32_0 = arith.constant 0 : i32
    return %1, %c0_i32 : i32, i32
  }
  func.func @transform_2(%arg0: i32, %arg1: i32) -> (i32, i32, i32) {
    %c0_i32 = arith.constant 0 : i32
    %c0_i32_0 = arith.constant 0 : i32
    %c0_i32_1 = arith.constant 0 : i32
    return %arg0, %c0_i32, %c0_i32_0 : i32, i32, i32
  }
}

</mosaic_0001>

<llo_original>
// kernel: tpu_custom_call.1
$region0: #{tpu_custom_call.1}
  #allocation0 [shape = 'u32[]', space=smem, size = 0x4, offset = 0x4, fixed_abs, tag = 'smem constant byte address 0x4 - core index']
  #allocation1 [shape = 'u32[144,128]{1,0:T(1,128)}', space=vmem, size = 0x12000, scoped, tag = 'internal scratch']
  %s0 = inlined_call_operand.hbm [shape: f32[16,128], index: 0, kind: input, shape index: {}]
  %s1 = inlined_call_operand.hbm [shape: f32[16,128], index: 1, kind: input, shape index: {}]
  %s2 = inlined_call_operand.hbm [shape: f32[1,8,128], index: 2, kind: output, shape index: {}]
  %s3 = sld [smem:[#allocation0]]
  $region30: #{tpu_custom_call.1} parent=0
    _
  %s5 = ssub.s32 1, %s3
  %s6 = scalar_select 0, %s5, %s3
  $region1: #{tpu_custom_call.1} parent=0
    #allocation2 [shape = 'u8[8192]{0}', space=vmem, size = 0x2000, scoped, tag = 'input window, operand 0, single buffered']
    #allocation3 [shape = 's32[1]{0}', space=sflag, size = 0x4, scoped, tag = 'scoped memory for tpu_custom_call.1']
    #allocation4 [shape = 's32[1]{0}', space=sflag, size = 0x4, scoped, tag = 'scoped memory for tpu_custom_call.1']
    #allocation5 [shape = 'u8[8192]{0}', space=vmem, size = 0x2000, scoped, tag = 'input window, operand 1, single buffered']
    #allocation6 [shape = 's32[1]{0}', space=sflag, size = 0x4, scoped, tag = 'scoped memory for tpu_custom_call.1']
    #allocation7 [shape = 'u8[4096]{0}', space=vmem, size = 0x1000, scoped, tag = 'output window, operand 0, single buffered']
    %7 = vsyncpa [#allocation3], 0
    %8 = vsyncpa [#allocation6], 0
    %9 = vsyncpa [#allocation4], 0
    // Predicated region
    $region2: #{tpu_custom_call.1} parent=1 // pred_check
      _
    $region3: #{tpu_custom_call.1} parent=1 // pred_check_branch
      %11 = sbr.rel (0) target = $region5
    $region4: #{tpu_custom_call.1} parent=1 // pred_region
      %s12 = sadd.s32 0, 0
      %s13 = smul.u32 2, %s12
      %s15 = ssub.s32 256, 256
      %16 = vsyncadd [#allocation3], %s15
      %s17 = smul.addr %s13, 128
      %s18 = scalar_lea.hbm %s0, %s17
      %s19 = sshll.u32 [#allocation2], 4
      %s20 = int_to_ptr.vmem [resolvable:$true] %s19
      %25 = dma.hbm_to_vmem [thread:$0]  %s18, 256, %s20, [#allocation3], 128, 128, 8
    $region5: #{tpu_custom_call.1} parent=1 // pred_fallthru
      _
    // Predicated region
    $region6: #{tpu_custom_call.1} parent=1 // pred_check
      _
    $region7: #{tpu_custom_call.1} parent=1 // pred_check_branch
      %27 = sbr.rel (0) target = $region9
    $region8: #{tpu_custom_call.1} parent=1 // pred_region
      %s28 = sadd.s32 0, 0
      %s29 = smul.u32 2, %s28
      %s31 = ssub.s32 256, 256
      %32 = vsyncadd [#allocation6], %s31
      %s33 = smul.addr %s29, 128
      %s34 = scalar_lea.hbm %s1, %s33
      %s35 = sshll.u32 [#allocation5], 4
      %s36 = int_to_ptr.vmem [resolvable:$true] %s35
      %41 = dma.hbm_to_vmem [thread:$0]  %s34, 256, %s36, [#allocation6], 128, 128, 8
    $region9: #{tpu_custom_call.1} parent=1 // pred_fallthru
      _
    // Predicated region
    $region10: #{tpu_custom_call.1} parent=1 // pred_check
      _
    $region11: #{tpu_custom_call.1} parent=1 // pred_check_branch
      %43 = sbr.rel (0) target = $region13
    $region12: #{tpu_custom_call.1} parent=1 // pred_region
      %44 = dma.done [#allocation3], 256
    $region13: #{tpu_custom_call.1} parent=1 // pred_fallthru
      _
    // Predicated region
    $region14: #{tpu_custom_call.1} parent=1 // pred_check
      _
    $region15: #{tpu_custom_call.1} parent=1 // pred_check_branch
      %46 = sbr.rel (0) target = $region17
    $region16: #{tpu_custom_call.1} parent=1 // pred_region
      %47 = dma.done [#allocation6], 256
    $region17: #{tpu_custom_call.1} parent=1 // pred_fallthru
      _
    %s48 = sadd.s32 0, 0
    %s49 = smul.u32 2, %s48
    %s50 = sadd.s32 0, 0
    %s51 = smul.u32 2, %s50
    %p52 = scmp.eq.s32.totalorder 0, 0
    // Predicated region
    $region18: #{tpu_custom_call.1} parent=1 // pred_check
      %p53 = pneg %p52
    $region19: #{tpu_custom_call.1} parent=1 // pred_check_branch
      %55 = sbr.rel (%p53) target = $region21
    $region20: #{tpu_custom_call.1} parent=1 // pred_region
      %56 = vst [vmem:[#allocation7] sm:$0xff] 0.0
    $region21: #{tpu_custom_call.1} parent=1 // pred_fallthru
      _
    %v57 = vld [vmem:[#allocation2] sm:$0xff]
    %v58 = vld [vmem:[#allocation2 + $0x8] sm:$0xff]
    %v59 = vld [vmem:[#allocation5] sm:$0xff]
    %v60 = vld [vmem:[#allocation5 + $0x8] sm:$0xff]
    %v61 = vsub.f32 %v57, %v59
    %v62 = vsub.f32 %v58, %v60
    %v63 = vmul.f32 %v61, %v61
    %v64 = vmul.f32 %v62, %v62
    %v65 = vld [vmem:[#allocation7] sm:$0xff]
    %v66 = vadd.f32 %v63, %v64
    %v67 = vadd.f32 %v65, %v66
    %68 = vst [vmem:[#allocation7] sm:$0xff] %v67
    // Predicated region
    $region22: #{tpu_custom_call.1} parent=1 // pred_check
      _
    $region23: #{tpu_custom_call.1} parent=1 // pred_check_branch
      %70 = sbr.rel (0) target = $region25
    $region24: #{tpu_custom_call.1} parent=1 // pred_region
      %s72 = ssub.s32 128, 128
      %73 = vsyncadd [#allocation4], %s72
      %s75 = sshll.u32 [#allocation7], 4
      %s76 = int_to_ptr.vmem [resolvable:$true] %s75
      %78 = dma.vmem_to_hbm [thread:$0]  %s76, 128, %s2, [#allocation4]
    $region25: #{tpu_custom_call.1} parent=1 // pred_fallthru
      _
    // Predicated region
    $region26: #{tpu_custom_call.1} parent=1 // pred_check
      _
    $region27: #{tpu_custom_call.1} parent=1 // pred_check_branch
      %80 = sbr.rel (0) target = $region29
    $region28: #{tpu_custom_call.1} parent=1 // pred_region
      %81 = dma.done [#allocation4], 128
    $region29: #{tpu_custom_call.1} parent=1 // pred_fallthru
      _
    %82 = vsyncpa [#allocation3], 1
    %83 = vsyncpa [#allocation6], 1
    %84 = vsyncpa [#allocation4], 1

</llo_original>
